<compile_context>
chip_gen: v6e
topology: v6e:2x2x1
jax: 0.10.0
libtpu: 0.0.40
codegen_flags: <defaults>
</compile_context>

<pallas_src>
import jax
import jax.numpy as jnp
from jax.experimental import pallas as pl
from jax.experimental.pallas import tpu as pltpu


ACTION_BOUND = 2.0
H1, H2, H3 = 64, 32, 16
SLAB_W = 64  # lane width of the packed parameter slab (max fout)


def _round8(n):
    return ((n + 7) // 8) * 8


def pack_params(params):
    """Pack w1,b1,...,w4,b4 into one (rows, 64) f32 slab, 8-row aligned segments.

    w4 is stored transposed (action_size, 16) so the kernel can do the final
    layer as elementwise-multiply + lane reduction instead of an MXU pass.
    Returns (slab, offsets) with offsets as static Python ints.
    """
    (w1, b1), (w2, b2), (w3, b3), (w4, b4) = params
    action_size = w4.shape[1]
    segs = [
        jnp.asarray(w1, jnp.float32),                     # (state_size, 64)
        jnp.asarray(b1, jnp.float32).reshape(1, H1),      # (1, 64)
        jnp.asarray(w2, jnp.float32),                     # (64, 32)
        jnp.asarray(b2, jnp.float32).reshape(1, H2),      # (1, 32)
        jnp.asarray(w3, jnp.float32),                     # (32, 16)
        jnp.asarray(b3, jnp.float32).reshape(1, H3),      # (1, 16)
        jnp.asarray(w4, jnp.float32).T,                   # (action_size, 16)
        jnp.asarray(b4, jnp.float32).reshape(1, action_size),
    ]
    offsets = []
    rows = 0
    for s in segs:
        offsets.append(rows)
        rows += _round8(s.shape[0])
    slab = jnp.zeros((rows, SLAB_W), jnp.float32)
    for off, s in zip(offsets, segs):
        slab = slab.at[off:off + s.shape[0], 0:s.shape[1]].set(s)
    return slab, tuple(offsets)


def make_actor_kernel(state_size, action_size, offs):
    o_w1, o_b1, o_w2, o_b2, o_w3, o_b3, o_w4, o_b4 = offs

    def kernel(x_ref, p_ref, o_ref):
        x = x_ref[...]                                    # (TB, state_size)

        # ---- Layer 1: K = state_size (tiny) -> VPU broadcast-FMA, no MXU ----
        b1 = p_ref[o_b1:o_b1 + 1, 0:H1]                   # (1, 64)
        h = x[:, 0:1] * p_ref[o_w1:o_w1 + 1, 0:H1]
        for k in range(1, state_size):
            h = h + x[:, k:k + 1] * p_ref[o_w1 + k:o_w1 + k + 1, 0:H1]
        h = jnp.maximum(h + b1, 0.0)                      # (TB, 64)

        # ---- Layer 2: (TB,64) @ (64,32) on the MXU ----
        w2 = p_ref[o_w2:o_w2 + H1, 0:H2]
        b2 = p_ref[o_b2:o_b2 + 1, 0:H2]
        h = jnp.dot(h, w2, preferred_element_type=jnp.float32) + b2
        h = jnp.maximum(h, 0.0)                           # (TB, 32)

        # ---- Layer 3: (TB,32) @ (32,16) on the MXU ----
        w3 = p_ref[o_w3:o_w3 + H2, 0:H3]
        b3 = p_ref[o_b3:o_b3 + 1, 0:H3]
        h = jnp.dot(h, w3, preferred_element_type=jnp.float32) + b3
        h = jnp.maximum(h, 0.0)                           # (TB, 16)

        # ---- Layer 4: N = action_size (tiny) -> multiply + lane reduce ----
        w4t = p_ref[o_w4:o_w4 + action_size, 0:H3]        # (A, 16) = W4^T
        b4 = p_ref[o_b4:o_b4 + 1, 0:action_size]          # (1, A)
        cols = [jnp.sum(h * w4t[a:a + 1, :], axis=-1, keepdims=True)
                for a in range(action_size)]
        z = cols[0] if action_size == 1 else jnp.concatenate(cols, axis=-1)
        o_ref[...] = jnp.tanh(z + b4) * ACTION_BOUND      # (TB, A)

    return kernel


def actor_forward(x, params, *, block_b=None):
    """Run the ActorNet forward pass as one Pallas kernel, tiled over batch."""
    B, state_size = x.shape
    action_size = params[-1][0].shape[1]

    slab, offs = pack_params(params)
    rows = slab.shape[0]

    # Batch tile: multiple of 8 sublanes; cover whole batch up to 512 rows/tile.
    if block_b is None:
        block_b = min(_round8(max(B, 1)), 512)
    b_pad = ((B + block_b - 1) // block_b) * block_b
    if b_pad != B:
        x = jnp.pad(x, ((0, b_pad - B), (0, 0)))
    x = x.astype(jnp.float32)

    kernel = make_actor_kernel(state_size, action_size, offs)

    flops = 2 * b_pad * (state_size * H1 + H1 * H2 + H2 * H3 + H3 * action_size)
    bytes_accessed = 4 * (x.size + slab.size + b_pad * action_size)
    cost = pl.CostEstimate(flops=flops,
                           transcendentals=b_pad * action_size,
                           bytes_accessed=bytes_accessed)

    out = pl.pallas_call(
        kernel,
        out_shape=jax.ShapeDtypeStruct((b_pad, action_size), jnp.float32),
        grid=(b_pad // block_b,),
        in_specs=[
            pl.BlockSpec((block_b, state_size), lambda i: (i, 0)),  # x tiles
            pl.BlockSpec((rows, SLAB_W), lambda i: (0, 0)),         # resident params
        ],
        out_specs=pl.BlockSpec((block_b, action_size), lambda i: (i, 0)),
        compiler_params=pltpu.CompilerParams(
            dimension_semantics=("parallel",)),
        cost_estimate=cost,
    )(x, slab)
    return out[:B]


def init_params(key, state_size, action_size):
    """Deterministic parameter init (uniform fan-in scaling), weights as (in, out)."""
    sizes = [(state_size, H1), (H1, H2), (H2, H3), (H3, action_size)]
    params = []
    for fin, fout in sizes:
        kw, kb, key = jax.random.split(key, 3)
        scale = 1.0 / jnp.sqrt(jnp.float32(fin))
        w = jax.random.uniform(kw, (fin, fout), jnp.float32, -scale, scale)
        b = jax.random.uniform(kb, (1, fout), jnp.float32, -scale, scale)
        params.append((w, b))
    return params


def actor_reference(x, params):
    """Pure-JAX reference of the PyTorch forward, for verification."""
    (w1, b1), (w2, b2), (w3, b3), (w4, b4) = params
    h = jnp.maximum(x @ w1 + b1, 0.0)
    h = jnp.maximum(h @ w2 + b2, 0.0)
    h = jnp.maximum(h @ w3 + b3, 0.0)
    return jnp.tanh(h @ w4 + b4) * ACTION_BOUND


if __name__ == "__main__":
    # Pendulum-v1: state_size=3, action_size=1; small batch.
    B, state_size, action_size = 4, 3, 1

    key = jax.random.PRNGKey(0)
    kx, kp = jax.random.split(key)
    x = jax.random.normal(kx, (B, state_size), jnp.float32)
    params = init_params(kp, state_size, action_size)

    out = actor_forward(x, params)
    out = jax.block_until_ready(out)

    ref = actor_reference(x, params)
    assert out.shape == (B, action_size)
    assert jnp.allclose(out, ref, atol=1e-5, rtol=1e-5), (out, ref)

    print("KERNEL_OK")
</pallas_src>

<mosaic_0001>
module attributes {stable_mosaic.version = 11 : i64} {
  func.func @kernel(%arg0: i32, %arg1: memref<8x3xf32, #tpu.memory_space<vmem>>, %arg2: memref<144x64xf32, #tpu.memory_space<vmem>>, %arg3: memref<8x1xf32, #tpu.memory_space<vmem>>) attributes {dimension_semantics = [#tpu.dimension_semantics<parallel>], iteration_bounds = array<i64: 1>, scalar_prefetch = 0 : i64, scratch_operands = 0 : i64, tpu.core_type = #tpu.core_type<tc>, window_params = [{transform_indices = @transform_0, window_bounds = array<i64: 8, 3>}, {pipeline_mode = #tpu.pipeline_mode<synchronous>, transform_indices = @transform_1, window_bounds = array<i64: 144, 64>}, {transform_indices = @transform_2, window_bounds = array<i64: 8, 1>}]} {
    %c0 = arith.constant 0 : index
    %c0_0 = arith.constant 0 : index
    %0 = vector.load %arg1[%c0, %c0_0] : memref<8x3xf32, #tpu.memory_space<vmem>>, vector<8x3xf32>
    %c8 = arith.constant 8 : index
    %c0_1 = arith.constant 0 : index
    %1 = vector.load %arg2[%c8, %c0_1] : memref<144x64xf32, #tpu.memory_space<vmem>>, vector<1x64xf32>
    %2 = vector.extract_strided_slice %0 {offsets = [0, 0], sizes = [8, 1], strides = [1, 1]} : vector<8x3xf32> to vector<8x1xf32>
    %c0_2 = arith.constant 0 : index
    %c0_3 = arith.constant 0 : index
    %3 = vector.load %arg2[%c0_2, %c0_3] : memref<144x64xf32, #tpu.memory_space<vmem>>, vector<1x64xf32>
    %4 = vector.broadcast %2 : vector<8x1xf32> to vector<8x64xf32>
    %5 = vector.broadcast %3 : vector<1x64xf32> to vector<8x64xf32>
    %6 = arith.mulf %4, %5 : vector<8x64xf32>
    %7 = vector.extract_strided_slice %0 {offsets = [0, 1], sizes = [8, 1], strides = [1, 1]} : vector<8x3xf32> to vector<8x1xf32>
    %c1 = arith.constant 1 : index
    %c0_4 = arith.constant 0 : index
    %8 = vector.load %arg2[%c1, %c0_4] : memref<144x64xf32, #tpu.memory_space<vmem>>, vector<1x64xf32>
    %9 = vector.broadcast %7 : vector<8x1xf32> to vector<8x64xf32>
    %10 = vector.broadcast %8 : vector<1x64xf32> to vector<8x64xf32>
    %11 = arith.mulf %9, %10 : vector<8x64xf32>
    %12 = arith.addf %6, %11 : vector<8x64xf32>
    %13 = vector.extract_strided_slice %0 {offsets = [0, 2], sizes = [8, 1], strides = [1, 1]} : vector<8x3xf32> to vector<8x1xf32>
    %c2 = arith.constant 2 : index
    %c0_5 = arith.constant 0 : index
    %14 = vector.load %arg2[%c2, %c0_5] : memref<144x64xf32, #tpu.memory_space<vmem>>, vector<1x64xf32>
    %15 = vector.broadcast %13 : vector<8x1xf32> to vector<8x64xf32>
    %16 = vector.broadcast %14 : vector<1x64xf32> to vector<8x64xf32>
    %17 = arith.mulf %15, %16 : vector<8x64xf32>
    %18 = arith.addf %12, %17 : vector<8x64xf32>
    %19 = vector.broadcast %1 : vector<1x64xf32> to vector<8x64xf32>
    %20 = arith.addf %18, %19 : vector<8x64xf32>
    %cst = arith.constant 0.000000e+00 : f32
    %21 = vector.broadcast %cst : f32 to vector<8x64xf32>
    %22 = arith.maximumf %20, %21 : vector<8x64xf32>
    %c16 = arith.constant 16 : index
    %c0_6 = arith.constant 0 : index
    %23 = vector.load %arg2[%c16, %c0_6] : memref<144x64xf32, #tpu.memory_space<vmem>>, vector<64x32xf32>
    %c80 = arith.constant 80 : index
    %c0_7 = arith.constant 0 : index
    %24 = vector.load %arg2[%c80, %c0_7] : memref<144x64xf32, #tpu.memory_space<vmem>>, vector<1x32xf32>
    %cst_8 = arith.constant dense<0.000000e+00> : vector<8x32xf32>
    %25 = tpu.matmul %22, %23, %cst_8 {dimension_numbers = #tpu.dot_dimension_numbers<[1], [0], [0], [1], [0, 0, 1, 1], [], []>} : vector<8x64xf32>, vector<64x32xf32>, vector<8x32xf32> -> vector<8x32xf32>
    %26 = vector.broadcast %24 : vector<1x32xf32> to vector<8x32xf32>
    %27 = arith.addf %25, %26 : vector<8x32xf32>
    %cst_9 = arith.constant 0.000000e+00 : f32
    %28 = vector.broadcast %cst_9 : f32 to vector<8x32xf32>
    %29 = arith.maximumf %27, %28 : vector<8x32xf32>
    %c88 = arith.constant 88 : index
    %c0_10 = arith.constant 0 : index
    %30 = vector.load %arg2[%c88, %c0_10] : memref<144x64xf32, #tpu.memory_space<vmem>>, vector<32x16xf32>
    %c120 = arith.constant 120 : index
    %c0_11 = arith.constant 0 : index
    %31 = vector.load %arg2[%c120, %c0_11] : memref<144x64xf32, #tpu.memory_space<vmem>>, vector<1x16xf32>
    %cst_12 = arith.constant dense<0.000000e+00> : vector<8x16xf32>
    %32 = tpu.matmul %29, %30, %cst_12 {dimension_numbers = #tpu.dot_dimension_numbers<[1], [0], [0], [1], [0, 0, 1, 1], [], []>} : vector<8x32xf32>, vector<32x16xf32>, vector<8x16xf32> -> vector<8x16xf32>
    %33 = vector.broadcast %31 : vector<1x16xf32> to vector<8x16xf32>
    %34 = arith.addf %32, %33 : vector<8x16xf32>
    %cst_13 = arith.constant 0.000000e+00 : f32
    %35 = vector.broadcast %cst_13 : f32 to vector<8x16xf32>
    %36 = arith.maximumf %34, %35 : vector<8x16xf32>
    %c128 = arith.constant 128 : index
    %c0_14 = arith.constant 0 : index
    %37 = vector.load %arg2[%c128, %c0_14] : memref<144x64xf32, #tpu.memory_space<vmem>>, vector<1x16xf32>
    %c136 = arith.constant 136 : index
    %c0_15 = arith.constant 0 : index
    %38 = vector.load %arg2[%c136, %c0_15] : memref<144x64xf32, #tpu.memory_space<vmem>>, vector<1x1xf32>
    %39 = vector.broadcast %37 : vector<1x16xf32> to vector<8x16xf32>
    %40 = arith.mulf %36, %39 : vector<8x16xf32>
    %cst_16 = arith.constant dense<0.000000e+00> : vector<8xf32>
    %41 = vector.multi_reduction <add>, %40, %cst_16 [1] : vector<8x16xf32> to vector<8xf32>
    %42 = vector.shape_cast %41 : vector<8xf32> to vector<8x1xf32>
    %43 = vector.broadcast %38 : vector<1x1xf32> to vector<8x1xf32>
    %44 = arith.addf %42, %43 : vector<8x1xf32>
    %45 = math.tanh %44 : vector<8x1xf32>
    %cst_17 = arith.constant 2.000000e+00 : f32
    %46 = vector.broadcast %cst_17 : f32 to vector<8x1xf32>
    %47 = arith.mulf %45, %46 : vector<8x1xf32>
    %c0_18 = arith.constant 0 : index
    %c0_19 = arith.constant 0 : index
    %48 = vector.load %arg3[%c0_18, %c0_19] : memref<8x1xf32, #tpu.memory_space<vmem>>, vector<8x1xf32>
    tpu.vector_store %arg3[%c0_18, %c0_19], %47 {strides = array<i32>} : memref<8x1xf32, #tpu.memory_space<vmem>>, vector<8x1xf32>,
    return
  }
  func.func @transform_0(%arg0: i32) -> (i32, i32) {
    %c0_i32 = arith.constant 0 : i32
    %c0_i32_0 = arith.constant 0 : i32
    return %arg0, %c0_i32 : i32, i32
  }
  func.func @transform_1(%arg0: i32) -> (i32, i32) {
    %c0_i32 = arith.constant 0 : i32
    %c0_i32_0 = arith.constant 0 : i32
    %c0_i32_1 = arith.constant 0 : i32
    return %c0_i32, %c0_i32_0 : i32, i32
  }
  func.func @transform_2(%arg0: i32) -> (i32, i32) {
    %c0_i32 = arith.constant 0 : i32
    %c0_i32_0 = arith.constant 0 : i32
    return %arg0, %c0_i32 : i32, i32
  }
}

</mosaic_0001>

<llo_original>
// kernel: tpu_custom_call.1
$region0: #{tpu_custom_call.1}
  #allocation0 [shape = 'u32[]', space=smem, size = 0x4, offset = 0x4, fixed_abs, tag = 'smem constant byte address 0x4 - core index']
  #allocation1 [shape = 'u32[144,128]{1,0:T(1,128)}', space=vmem, size = 0x12000, scoped, tag = 'internal scratch']
  %s0 = inlined_call_operand.vmem [shape: f32[8,3], index: 0, kind: input, shape index: {}]
  %s1 = inlined_call_operand.vmem [shape: f32[144,64], index: 1, kind: input, shape index: {}]
  %s2 = inlined_call_operand.vmem [shape: f32[8,1], index: 2, kind: output, shape index: {}]
  %s3 = sld [smem:[#allocation0]]
  $region18: #{tpu_custom_call.1} parent=0
    _
  %s5 = ssub.s32 1, %s3
  %s6 = scalar_select 0, %s5, %s3
  // Predicated region
  $region2: #{tpu_custom_call.1} parent=0 // pred_check
    _
  $region3: #{tpu_custom_call.1} parent=0 // pred_check_branch
    %8 = sbr.rel (0) target = $region5
  $region4: #{tpu_custom_call.1} parent=0 // pred_region
    _
  $region5: #{tpu_custom_call.1} parent=0 // pred_fallthru
    _
  // Predicated region
  $region6: #{tpu_custom_call.1} parent=0 // pred_check
    _
  $region7: #{tpu_custom_call.1} parent=0 // pred_check_branch
    %10 = sbr.rel (0) target = $region9
  $region8: #{tpu_custom_call.1} parent=0 // pred_region
    _
  $region9: #{tpu_custom_call.1} parent=0 // pred_fallthru
    _
  %v11 = vld [vmem:[%s0] sm:$0xff]
  %v12 = vld [vmem:[%s1 + $0x8] sm:$0x1]
  %v13 = vld [vmem:[%s1] sm:$0x1]
  %15 = vset.pattern.permute.xlu0 0
  %16 = vperm.xlu0 %15, %v11
  %v17 = vpop.permute.xlu0 %16
  %v19 = vlaneseq
  %v20 = vshrl.u32 %v19, 7
  %v21 = vsub.s32 0, %v20
  %v22 = vrot.slane %v13, %v21
  %v23 = vmul.f32 %v17, %v22
  %v24 = vld [vmem:[%s1 + $0x1] sm:$0x1]
  %25 = vset.pattern.permute.xlu0 1
  %26 = vperm.xlu0 %25, %v11
  %v27 = vpop.permute.xlu0 %26
  %v29 = vlaneseq
  %v30 = vshrl.u32 %v29, 7
  %v31 = vsub.s32 0, %v30
  %v32 = vrot.slane %v24, %v31
  %v33 = vmul.f32 %v27, %v32
  %v34 = vadd.f32 %v23, %v33
  %v35 = vld [vmem:[%s1 + $0x2] sm:$0x1]
  %36 = vset.pattern.permute.xlu0 2
  %37 = vperm.xlu0 %36, %v11
  %v38 = vpop.permute.xlu0 %37
  %v40 = vlaneseq
  %v41 = vshrl.u32 %v40, 7
  %v42 = vsub.s32 0, %v41
  %v43 = vrot.slane %v35, %v42
  %v44 = vmul.f32 %v38, %v43
  %v45 = vadd.f32 %v34, %v44
  %v46 = vlaneseq
  %v47 = vshrl.u32 %v46, 7
  %v48 = vsub.s32 0, %v47
  %v49 = vrot.slane %v12, %v48
  %v50 = vadd.f32 %v45, %v49
  %v51 = vmax.f32 %v50, 0.0
  %v52 = vld [vmem:[%s1 + $0x10] sm:$0xff]
  %v53 = vld [vmem:[%s1 + $0x18] sm:$0xff]
  %v54 = vld [vmem:[%s1 + $0x20] sm:$0xff]
  %v55 = vld [vmem:[%s1 + $0x28] sm:$0xff]
  %v56 = vld [vmem:[%s1 + $0x30] sm:$0xff]
  %v57 = vld [vmem:[%s1 + $0x38] sm:$0xff]
  %v58 = vld [vmem:[%s1 + $0x40] sm:$0xff]
  %v59 = vld [vmem:[%s1 + $0x48] sm:$0xff]
  %v60 = vld [vmem:[%s1 + $0x50] sm:$0x1]
  %v61 = vlaneseq
  %v62 = vshrl.u32 %v61, 7
  %v63 = vsub.s32 0, %v62
  %v64 = vrot.slane %v60, %v63
  %vm65 = vcmask 523264
  %v67 = vsel %vm65, %v51, 0
  %69 = vmatprep.subr.mxu0 0.0
  %70 = vmatpush1.msra.mxu0 0.0
  %71 = vmatprep.subr.mxu0 0.0
  %72 = vmatpush1.msra.mxu0 0.0
  %73 = vmatprep.subr.mxu0 0.0
  %74 = vmatpush1.msra.mxu0 0.0
  %75 = vmatprep.subr.mxu0 0.0
  %76 = vmatpush1.msra.mxu0 0.0
  %77 = vmatprep.subr.mxu0 0.0
  %78 = vmatpush1.msra.mxu0 0.0
  %79 = vmatprep.subr.mxu0 0.0
  %80 = vmatpush1.msra.mxu0 0.0
  %81 = vmatprep.subr.mxu0 0.0
  %82 = vmatpush1.msra.mxu0 0.0
  %83 = vmatprep.subr.mxu0 0.0
  %84 = vmatpush1.msra.mxu0 0.0
  %85 = vmatprep.subr.mxu0 0.0
  %86 = vmatpush1.msra.mxu0 %v59
  %87 = vmatprep.subr.mxu0 0.0
  %88 = vmatpush1.msra.mxu0 %v58
  %89 = vmatprep.subr.mxu0 0.0
  %90 = vmatpush1.msra.mxu0 %v57
  %91 = vmatprep.subr.mxu0 0.0
  %92 = vmatpush1.msra.mxu0 %v56
  %93 = vmatprep.subr.mxu0 0.0
  %94 = vmatpush1.msra.mxu0 %v55
  %95 = vmatprep.subr.mxu0 0.0
  %96 = vmatpush1.msra.mxu0 %v54
  %97 = vmatprep.subr.mxu0 0.0
  %98 = vmatpush1.msra.mxu0 %v53
  %99 = vmatprep.subr.mxu0 0.0
  %100 = vmatpush1.msra.mxu0 %v52
  %101 = vmatprep.subr.mxu0 0.0
  %102 = vmatpush2.msra.mxu0 0.0
  %103 = vmatprep.subr.mxu0 0.0
  %104 = vmatpush2.msra.mxu0 0.0
  %105 = vmatprep.subr.mxu0 0.0
  %106 = vmatpush2.msra.mxu0 0.0
  %107 = vmatprep.subr.mxu0 0.0
  %108 = vmatpush2.msra.mxu0 0.0
  %109 = vmatprep.subr.mxu0 0.0
  %110 = vmatpush2.msra.mxu0 0.0
  %111 = vmatprep.subr.mxu0 0.0
  %112 = vmatpush2.msra.mxu0 0.0
  %113 = vmatprep.subr.mxu0 0.0
  %114 = vmatpush2.msra.mxu0 0.0
  %115 = vmatprep.subr.mxu0 0.0
  %116 = vmatpush2.msra.mxu0 0.0
  %117 = vmatprep.subr.mxu0 0.0
  %118 = vmatpush2.msra.mxu0 0.0
  %119 = vmatprep.subr.mxu0 0.0
  %120 = vmatpush2.msra.mxu0 0.0
  %121 = vmatprep.subr.mxu0 0.0
  %122 = vmatpush2.msra.mxu0 0.0
  %123 = vmatprep.subr.mxu0 0.0
  %124 = vmatpush2.msra.mxu0 0.0
  %125 = vmatprep.subr.mxu0 0.0
  %126 = vmatpush2.msra.mxu0 0.0
  %127 = vmatprep.subr.mxu0 0.0
  %128 = vmatpush2.msra.mxu0 0.0
  %129 = vmatprep.subr.mxu0 0.0
  %130 = vmatpush2.msra.mxu0 0.0
  %131 = vmatprep.subr.mxu0 0.0
  %132 = vmatpush2.msra.mxu0 0.0
  %133 = vmatprep.mubr.f32.mxu0 0.0
  %134 = vmatmul.mubr.f32.gmra.mxu0 %v67
  %v135 = vpop.f32.mrf.mxu0
  %v136 = vadd.f32 %v64, %v135
  %v137 = vpop.f32.mrf.mxu0
  %138 = vdwg.mxu0
  %v139 = vmax.f32 %v136, 0.0
  %v140 = vld [vmem:[%s1 + $0x58] sm:$0xff]
  %v141 = vld [vmem:[%s1 + $0x60] sm:$0xff]
  %v142 = vld [vmem:[%s1 + $0x68] sm:$0xff]
  %v143 = vld [vmem:[%s1 + $0x70] sm:$0xff]
  %v144 = vld [vmem:[%s1 + $0x78] sm:$0x1]
  %v145 = vlaneseq
  %v146 = vshrl.u32 %v145, 7
  %v147 = vsub.s32 0, %v146
  %v148 = vrot.slane %v144, %v147
  %vm149 = vcmask 261120
  %v151 = vsel %vm149, %v139, 0
  %153 = vmatprep.subr.mxu0 0.0
  %154 = vmatpush1.msra.mxu0 0.0
  %155 = vmatprep.subr.mxu0 0.0
  %156 = vmatpush1.msra.mxu0 0.0
  %157 = vmatprep.subr.mxu0 0.0
  %158 = vmatpush1.msra.mxu0 0.0
  %159 = vmatprep.subr.mxu0 0.0
  %160 = vmatpush1.msra.mxu0 0.0
  %161 = vmatprep.subr.mxu0 0.0
  %162 = vmatpush1.msra.mxu0 0.0
  %163 = vmatprep.subr.mxu0 0.0
  %164 = vmatpush1.msra.mxu0 0.0
  %165 = vmatprep.subr.mxu0 0.0
  %166 = vmatpush1.msra.mxu0 0.0
  %167 = vmatprep.subr.mxu0 0.0
  %168 = vmatpush1.msra.mxu0 0.0
  %169 = vmatprep.subr.mxu0 0.0
  %170 = vmatpush1.msra.mxu0 0.0
  %171 = vmatprep.subr.mxu0 0.0
  %172 = vmatpush1.msra.mxu0 0.0
  %173 = vmatprep.subr.mxu0 0.0
  %174 = vmatpush1.msra.mxu0 0.0
  %175 = vmatprep.subr.mxu0 0.0
  %176 = vmatpush1.msra.mxu0 0.0
  %177 = vmatprep.subr.mxu0 0.0
  %178 = vmatpush1.msra.mxu0 %v143
  %179 = vmatprep.subr.mxu0 0.0
  %180 = vmatpush1.msra.mxu0 %v142
  %181 = vmatprep.subr.mxu0 0.0
  %182 = vmatpush1.msra.mxu0 %v141
  %183 = vmatprep.subr.mxu0 0.0
  %184 = vmatpush1.msra.mxu0 %v140
  %185 = vmatprep.subr.mxu0 0.0
  %186 = vmatpush2.msra.mxu0 0.0
  %187 = vmatprep.subr.mxu0 0.0
  %188 = vmatpush2.msra.mxu0 0.0
  %189 = vmatprep.subr.mxu0 0.0
  %190 = vmatpush2.msra.mxu0 0.0
  %191 = vmatprep.subr.mxu0 0.0
  %192 = vmatpush2.msra.mxu0 0.0
  %193 = vmatprep.subr.mxu0 0.0
  %194 = vmatpush2.msra.mxu0 0.0
  %195 = vmatprep.subr.mxu0 0.0
  %196 = vmatpush2.msra.mxu0 0.0
  %197 = vmatprep.subr.mxu0 0.0
  %198 = vmatpush2.msra.mxu0 0.0
  %199 = vmatprep.subr.mxu0 0.0
  %200 = vmatpush2.msra.mxu0 0.0
  %201 = vmatprep.subr.mxu0 0.0
  %202 = vmatpush2.msra.mxu0 0.0
  %203 = vmatprep.subr.mxu0 0.0
  %204 = vmatpush2.msra.mxu0 0.0
  %205 = vmatprep.subr.mxu0 0.0
  %206 = vmatpush2.msra.mxu0 0.0
  %207 = vmatprep.subr.mxu0 0.0
  %208 = vmatpush2.msra.mxu0 0.0
  %209 = vmatprep.subr.mxu0 0.0
  %210 = vmatpush2.msra.mxu0 0.0
  %211 = vmatprep.subr.mxu0 0.0
  %212 = vmatpush2.msra.mxu0 0.0
  %213 = vmatprep.subr.mxu0 0.0
  %214 = vmatpush2.msra.mxu0 0.0
  %215 = vmatprep.subr.mxu0 0.0
  %216 = vmatpush2.msra.mxu0 0.0
  %217 = vmatprep.mubr.f32.mxu0 0.0
  %218 = vmatmul.mubr.f32.gmra.mxu0 %v151
  %v219 = vpop.f32.mrf.mxu0
  %v220 = vadd.f32 %v148, %v219
  %v221 = vpop.f32.mrf.mxu0
  %222 = vdwg.mxu0
  %v223 = vmax.f32 %v220, 0.0
  %v224 = vld [vmem:[%s1 + $0x80] sm:$0x1]
  %v225 = vld [vmem:[%s1 + $0x88] sm:$0x1]
  %v226 = vlaneseq
  %v227 = vshrl.u32 %v226, 7
  %v228 = vsub.s32 0, %v227
  %v229 = vrot.slane %v224, %v228
  %v230 = vmul.f32 %v223, %v229
  %vm231 = vcmask 130048
  %v232 = vsel %vm231, %v230, 0.0
  %233 = vadd.xlane.f32.xlu0 %v232
  %v234 = vpop.xlane.xlu0 %233
  %v235 = vlaneseq
  %v236 = vshrl.u32 %v235, 7
  %v237 = vsub.s32 0, %v236
  %v238 = vrot.slane %v225, %v237
  %v239 = vadd.f32 %v234, %v238
  %v240 = vtanh.pop %v239
  %v241 = vmul.f32 %v240, 2.0
  %vm242 = vcmask 7168
  %243 = vst.msk [vmem:[%s2] sm:$0xff] %vm242, %v241
  // Predicated region
  $region10: #{tpu_custom_call.1} parent=0 // pred_check
    _
  $region11: #{tpu_custom_call.1} parent=0 // pred_check_branch
    %245 = sbr.rel (0) target = $region13
  $region12: #{tpu_custom_call.1} parent=0 // pred_region
    _
  $region13: #{tpu_custom_call.1} parent=0 // pred_fallthru
    _
  // Predicated region
  $region14: #{tpu_custom_call.1} parent=0 // pred_check
    _
  $region15: #{tpu_custom_call.1} parent=0 // pred_check_branch
    %247 = sbr.rel (0) target = $region17
  $region16: #{tpu_custom_call.1} parent=0 // pred_region
    _
  $region17: #{tpu_custom_call.1} parent=0 // pred_fallthru
    _

</llo_original>
